<compile_context>
chip_gen: v5e
topology: v5e:2x2
jax: 0.10.0
libtpu: 0.0.40
codegen_flags: <defaults>
</compile_context>

<pallas_src>
import functools

import jax
import jax.numpy as jnp
from jax import lax
from jax.experimental import pallas as pl
from jax.experimental.pallas import tpu as pltpu

GAMMA = 1.0  # FocalLoss.__init__ default (module-level gamma=0.7 is unused by the class)


def _focal_loss_kernel(x_ref, t_ref, out_ref, acc_nll_ref, acc_focal_ref, *,
                       gamma, n_total, tile_n):
    # x_ref: (tile_n, C) logits (native dtype), t_ref: (tile_n, 1) int32,
    # out_ref: (1, 1) f32, acc_*: (1, 1) f32 VMEM scratch (persist across grid).
    i = pl.program_id(0)

    @pl.when(i == 0)
    def _init():
        acc_nll_ref[...] = jnp.zeros_like(acc_nll_ref)
        acc_focal_ref[...] = jnp.zeros_like(acc_focal_ref)

    x = x_ref[...].astype(jnp.float32)                      # (tile_n, C)
    t = t_ref[...]                                          # (tile_n, 1) int32
    tn, c = x.shape

    # Valid-row mask for the (possibly partial) last tile.
    row = i * tile_n + lax.broadcasted_iota(jnp.int32, (tn, 1), 0)
    vmask = row < n_total                                   # (tile_n, 1) bool

    # log_softmax over the class axis (dim=1 in the PyTorch reference),
    # with the per-row gather fused into the pre-softmax values.
    m = jnp.max(x, axis=1, keepdims=True)                   # (tile_n, 1)
    z = x - m
    lse = jnp.log(jnp.sum(jnp.exp(z), axis=1, keepdims=True))
    col = lax.broadcasted_iota(jnp.int32, (tn, c), 1)
    z_t = jnp.sum(jnp.where(col == t, z, 0.0), axis=1, keepdims=True)
    log_pt = z_t - lse                                      # (tile_n, 1)

    pt = jnp.exp(log_pt)
    one_m_pt = 1.0 - pt
    # Specialize focal term on the static gamma (avoid jnp.power -> exp/log).
    if gamma == 0.0:
        focal = jnp.ones_like(one_m_pt)
    elif gamma == 1.0:
        focal = one_m_pt
    elif gamma == 2.0:
        focal = one_m_pt * one_m_pt
    else:
        focal = jnp.exp(jnp.float32(gamma) * jnp.log1p(-pt))

    nll = jnp.where(vmask, -log_pt, 0.0)                    # (tile_n, 1)
    focal = jnp.where(vmask, focal, 0.0)

    acc_nll_ref[...] += jnp.sum(nll, keepdims=True)         # (1, 1)
    acc_focal_ref[...] += jnp.sum(focal, keepdims=True)     # (1, 1)

    @pl.when(i == pl.num_programs(0) - 1)
    def _finalize():
        inv_n = jnp.float32(1.0 / n_total)
        ce = acc_nll_ref[...] * inv_n                       # mean NLL (scalar, (1,1))
        mean_focal = acc_focal_ref[...] * inv_n
        # loss = mean(focal_term * ce) == mean(focal) * ce (ce is a scalar)
        out_ref[...] = mean_focal * ce


def focal_loss(logits, targets, gamma=GAMMA, tile_n=512):
    n, c = logits.shape
    # Tile over N; second-to-last block dim must be a multiple of 8 or the
    # full extent. Partial last tiles are masked inside the kernel.
    tile_n = min(tile_n, n)
    if tile_n < n:
        tile_n = max(8, (tile_n // 8) * 8)
    grid = (pl.cdiv(n, tile_n),)

    t2 = targets.reshape(n, 1).astype(jnp.int32)

    out = pl.pallas_call(
        functools.partial(_focal_loss_kernel, gamma=float(gamma),
                          n_total=n, tile_n=tile_n),
        out_shape=jax.ShapeDtypeStruct((1, 1), jnp.float32),
        grid_spec=pltpu.PrefetchScalarGridSpec(
            num_scalar_prefetch=0,
            grid=grid,
            in_specs=[
                pl.BlockSpec((tile_n, c), lambda i: (i, 0)),   # logits, native dtype
                pl.BlockSpec((tile_n, 1), lambda i: (i, 0)),   # targets
            ],
            out_specs=pl.BlockSpec((1, 1), lambda i: (0, 0)),  # resident accumulator-style output
            scratch_shapes=[
                pltpu.VMEM((1, 1), jnp.float32),               # sum(-log_pt)
                pltpu.VMEM((1, 1), jnp.float32),               # sum(focal)
            ],
        ),
        compiler_params=pltpu.CompilerParams(
            dimension_semantics=("arbitrary",),
        ),
    )(logits, t2)   # NOTE: no wrapper-side f32 upcast; cast happens in-kernel
    return out[0, 0]


def focal_loss_ref(logits, targets, gamma=GAMMA):
    # pure-JAX reference mirroring the PyTorch module
    log_p = jax.nn.log_softmax(logits.astype(jnp.float32), axis=1)
    log_pt = log_p[jnp.arange(logits.shape[0]), targets]
    ce = -jnp.mean(log_pt)
    pt = jnp.exp(log_pt)
    focal = (1.0 - pt) ** gamma
    return jnp.mean(focal * ce)


if __name__ == "__main__":
    key = jax.random.PRNGKey(0)
    k1, k2 = jax.random.split(key)

    N, C = 8, 32                       # batch of 8 rows, 32 classes
    logits = jax.random.normal(k1, (N, C), dtype=jnp.float32)
    targets = jax.random.randint(k2, (N,), 0, C, dtype=jnp.int32)

    loss = focal_loss(logits, targets)
    jax.block_until_ready(loss)

    ref = focal_loss_ref(logits, targets)
    assert jnp.allclose(loss, ref, rtol=1e-5, atol=1e-6), (loss, ref)

    print("KERNEL_OK")
</pallas_src>

<mosaic_0001>
module attributes {stable_mosaic.version = 11 : i64} {
  func.func @_focal_loss_kernel(%arg0: i32, %arg1: memref<8x32xf32, #tpu.memory_space<vmem>>, %arg2: memref<8x1xi32, #tpu.memory_space<vmem>>, %arg3: memref<1x1xf32, #tpu.memory_space<vmem>>, %arg4: memref<1x1xf32, #tpu.memory_space<vmem>>, %arg5: memref<1x1xf32, #tpu.memory_space<vmem>>) attributes {dimension_semantics = [#tpu.dimension_semantics<arbitrary>], iteration_bounds = array<i64: 1>, scalar_prefetch = 0 : i64, scratch_operands = 2 : i64, tpu.core_type = #tpu.core_type<tc>, window_params = [{transform_indices = @transform_0, window_bounds = array<i64: 8, 32>}, {transform_indices = @transform_1, window_bounds = array<i64: 8, 1>}, {pipeline_mode = #tpu.pipeline_mode<synchronous>, transform_indices = @transform_2, window_bounds = array<i64: 1, 1>}]} {
    %c0_i32 = arith.constant 0 : i32
    %0 = arith.cmpi eq, %arg0, %c0_i32 : i32
    %1 = arith.extui %0 : i1 to i32
    %c0_i32_0 = arith.constant 0 : i32
    %2 = arith.cmpi ne, %1, %c0_i32_0 : i32
    scf.if %2 {
      %cst_24 = arith.constant 0.000000e+00 : f32
      %55 = vector.broadcast %cst_24 : f32 to vector<1x1xf32>
      %c0_25 = arith.constant 0 : index
      %c0_26 = arith.constant 0 : index
      %56 = vector.load %arg4[%c0_25, %c0_26] : memref<1x1xf32, #tpu.memory_space<vmem>>, vector<1x1xf32>
      tpu.vector_store %arg4[%c0_25, %c0_26], %55 {strides = array<i32>} : memref<1x1xf32, #tpu.memory_space<vmem>>, vector<1x1xf32>,
      %cst_27 = arith.constant 0.000000e+00 : f32
      %57 = vector.broadcast %cst_27 : f32 to vector<1x1xf32>
      %c0_28 = arith.constant 0 : index
      %c0_29 = arith.constant 0 : index
      %58 = vector.load %arg5[%c0_28, %c0_29] : memref<1x1xf32, #tpu.memory_space<vmem>>, vector<1x1xf32>
      tpu.vector_store %arg5[%c0_28, %c0_29], %57 {strides = array<i32>} : memref<1x1xf32, #tpu.memory_space<vmem>>, vector<1x1xf32>,
    } else {
    }
    %c0 = arith.constant 0 : index
    %c0_1 = arith.constant 0 : index
    %3 = vector.load %arg1[%c0, %c0_1] : memref<8x32xf32, #tpu.memory_space<vmem>>, vector<8x32xf32>
    %c0_2 = arith.constant 0 : index
    %c0_3 = arith.constant 0 : index
    %4 = vector.load %arg2[%c0_2, %c0_3] : memref<8x1xi32, #tpu.memory_space<vmem>>, vector<8x1xi32>
    %c8_i32 = arith.constant 8 : i32
    %5 = arith.muli %arg0, %c8_i32 : i32
    %6 = tpu.iota {dimensions = array<i32: 0>} : vector<8x1xi32>
    %7 = vector.broadcast %5 : i32 to vector<8x1xi32>
    %8 = arith.addi %7, %6 : vector<8x1xi32>
    %c8_i32_4 = arith.constant 8 : i32
    %9 = vector.broadcast %c8_i32_4 : i32 to vector<8x1xi32>
    %10 = arith.cmpi slt, %8, %9 : vector<8x1xi32>
    %cst = arith.constant dense<0xFF800000> : vector<8xf32>
    %11 = vector.multi_reduction <maximumf>, %3, %cst [1] : vector<8x32xf32> to vector<8xf32>
    %12 = vector.shape_cast %11 : vector<8xf32> to vector<8x1xf32>
    %13 = vector.broadcast %12 : vector<8x1xf32> to vector<8x32xf32>
    %14 = arith.subf %3, %13 : vector<8x32xf32>
    %15 = math.exp %14 : vector<8x32xf32>
    %cst_5 = arith.constant dense<0.000000e+00> : vector<8xf32>
    %16 = vector.multi_reduction <add>, %15, %cst_5 [1] : vector<8x32xf32> to vector<8xf32>
    %17 = vector.shape_cast %16 : vector<8xf32> to vector<8x1xf32>
    %18 = math.log %17 : vector<8x1xf32>
    %19 = tpu.iota {dimensions = array<i32: 1>} : vector<8x32xi32>
    %20 = vector.broadcast %4 : vector<8x1xi32> to vector<8x32xi32>
    %21 = arith.cmpi eq, %19, %20 : vector<8x32xi32>
    %cst_6 = arith.constant 0.000000e+00 : f32
    %22 = vector.broadcast %cst_6 : f32 to vector<8x32xf32>
    %23 = arith.select %21, %14, %22 : vector<8x32xi1>, vector<8x32xf32>
    %cst_7 = arith.constant dense<0.000000e+00> : vector<8xf32>
    %24 = vector.multi_reduction <add>, %23, %cst_7 [1] : vector<8x32xf32> to vector<8xf32>
    %25 = vector.shape_cast %24 : vector<8xf32> to vector<8x1xf32>
    %26 = arith.subf %25, %18 : vector<8x1xf32>
    %27 = math.exp %26 : vector<8x1xf32>
    %cst_8 = arith.constant 1.000000e+00 : f32
    %28 = vector.broadcast %cst_8 : f32 to vector<8x1xf32>
    %29 = arith.subf %28, %27 : vector<8x1xf32>
    %cst_9 = arith.constant 0.000000e+00 : f32
    %30 = vector.broadcast %cst_9 : f32 to vector<8x1xf32>
    %31 = arith.subf %30, %26 : vector<8x1xf32>
    %cst_10 = arith.constant 0.000000e+00 : f32
    %32 = vector.broadcast %cst_10 : f32 to vector<8x1xf32>
    %33 = arith.select %10, %31, %32 : vector<8x1xi1>, vector<8x1xf32>
    %cst_11 = arith.constant 0.000000e+00 : f32
    %34 = vector.broadcast %cst_11 : f32 to vector<8x1xf32>
    %35 = arith.select %10, %29, %34 : vector<8x1xi1>, vector<8x1xf32>
    %c0_12 = arith.constant 0 : index
    %c0_13 = arith.constant 0 : index
    %36 = vector.load %arg4[%c0_12, %c0_13] : memref<1x1xf32, #tpu.memory_space<vmem>>, vector<1x1xf32>
    %37 = vector.shape_cast %33 : vector<8x1xf32> to vector<1x8x1xf32>
    %cst_14 = arith.constant dense<0.000000e+00> : vector<1xf32>
    %38 = vector.multi_reduction <add>, %37, %cst_14 [1, 2] : vector<1x8x1xf32> to vector<1xf32>
    %39 = vector.shape_cast %38 : vector<1xf32> to vector<1x1x1xf32>
    %40 = vector.extract %39[0, 0, 0] : f32 from vector<1x1x1xf32>
    %41 = vector.broadcast %40 : f32 to vector<1x1xf32>
    %42 = arith.addf %36, %41 : vector<1x1xf32>
    %c0_15 = arith.constant 0 : index
    %c0_16 = arith.constant 0 : index
    %43 = vector.load %arg4[%c0_15, %c0_16] : memref<1x1xf32, #tpu.memory_space<vmem>>, vector<1x1xf32>
    tpu.vector_store %arg4[%c0_15, %c0_16], %42 {strides = array<i32>} : memref<1x1xf32, #tpu.memory_space<vmem>>, vector<1x1xf32>,
    %c0_17 = arith.constant 0 : index
    %c0_18 = arith.constant 0 : index
    %44 = vector.load %arg5[%c0_17, %c0_18] : memref<1x1xf32, #tpu.memory_space<vmem>>, vector<1x1xf32>
    %45 = vector.shape_cast %35 : vector<8x1xf32> to vector<1x8x1xf32>
    %cst_19 = arith.constant dense<0.000000e+00> : vector<1xf32>
    %46 = vector.multi_reduction <add>, %45, %cst_19 [1, 2] : vector<1x8x1xf32> to vector<1xf32>
    %47 = vector.shape_cast %46 : vector<1xf32> to vector<1x1x1xf32>
    %48 = vector.extract %47[0, 0, 0] : f32 from vector<1x1x1xf32>
    %49 = vector.broadcast %48 : f32 to vector<1x1xf32>
    %50 = arith.addf %44, %49 : vector<1x1xf32>
    %c0_20 = arith.constant 0 : index
    %c0_21 = arith.constant 0 : index
    %51 = vector.load %arg5[%c0_20, %c0_21] : memref<1x1xf32, #tpu.memory_space<vmem>>, vector<1x1xf32>
    tpu.vector_store %arg5[%c0_20, %c0_21], %50 {strides = array<i32>} : memref<1x1xf32, #tpu.memory_space<vmem>>, vector<1x1xf32>,
    %c0_i32_22 = arith.constant 0 : i32
    %52 = arith.cmpi eq, %arg0, %c0_i32_22 : i32
    %53 = arith.extui %52 : i1 to i32
    %c0_i32_23 = arith.constant 0 : i32
    %54 = arith.cmpi ne, %53, %c0_i32_23 : i32
    scf.if %54 {
      %c0_24 = arith.constant 0 : index
      %c0_25 = arith.constant 0 : index
      %55 = vector.load %arg4[%c0_24, %c0_25] : memref<1x1xf32, #tpu.memory_space<vmem>>, vector<1x1xf32>
      %cst_26 = arith.constant 1.250000e-01 : f32
      %56 = vector.broadcast %cst_26 : f32 to vector<1x1xf32>
      %57 = arith.mulf %55, %56 : vector<1x1xf32>
      %c0_27 = arith.constant 0 : index
      %c0_28 = arith.constant 0 : index
      %58 = vector.load %arg5[%c0_27, %c0_28] : memref<1x1xf32, #tpu.memory_space<vmem>>, vector<1x1xf32>
      %cst_29 = arith.constant 1.250000e-01 : f32
      %59 = vector.broadcast %cst_29 : f32 to vector<1x1xf32>
      %60 = arith.mulf %58, %59 : vector<1x1xf32>
      %61 = arith.mulf %60, %57 : vector<1x1xf32>
      %c0_30 = arith.constant 0 : index
      %c0_31 = arith.constant 0 : index
      %62 = vector.load %arg3[%c0_30, %c0_31] : memref<1x1xf32, #tpu.memory_space<vmem>>, vector<1x1xf32>
      tpu.vector_store %arg3[%c0_30, %c0_31], %61 {strides = array<i32>} : memref<1x1xf32, #tpu.memory_space<vmem>>, vector<1x1xf32>,
    } else {
    }
    return
  }
  func.func @transform_0(%arg0: i32) -> (i32, i32) {
    %c0_i32 = arith.constant 0 : i32
    %c0_i32_0 = arith.constant 0 : i32
    return %arg0, %c0_i32 : i32, i32
  }
  func.func @transform_1(%arg0: i32) -> (i32, i32) {
    %c0_i32 = arith.constant 0 : i32
    %c0_i32_0 = arith.constant 0 : i32
    return %arg0, %c0_i32 : i32, i32
  }
  func.func @transform_2(%arg0: i32) -> (i32, i32) {
    %c0_i32 = arith.constant 0 : i32
    %c0_i32_0 = arith.constant 0 : i32
    %c0_i32_1 = arith.constant 0 : i32
    return %c0_i32, %c0_i32_0 : i32, i32
  }
}

</mosaic_0001>

<llo_original>
// kernel: tpu_custom_call.1
$region0: #{tpu_custom_call.1}
  #allocation0 [shape = 'u32[]', space=smem, size = 0x4, offset = 0x4, fixed_abs, tag = 'smem constant byte address 0x4 - core index']
  #allocation1 [shape = 'u32[72,128]{1,0:T(1,128)}', space=vmem, size = 0x9000, scoped, tag = 'internal scratch']
  #allocation2 [shape = 'f32[1,1]{1,0:T(1,128)}', space=vmem, size = 0x200, scoped, tag = 'scratch operand']
  #allocation3 [shape = 'f32[1,1]{1,0:T(1,128)}', space=vmem, size = 0x200, scoped, tag = 'scratch operand']
  %s0 = inlined_call_operand.vmem [shape: f32[8,32], index: 0, kind: input, shape index: {}]
  %s1 = inlined_call_operand.vmem [shape: s32[8,1], index: 1, kind: input, shape index: {}]
  %s2 = inlined_call_operand.hbm [shape: f32[1,1], index: 2, kind: output, shape index: {}]
  %s3 = sld [smem:[#allocation0]]
  $region26: #{tpu_custom_call.1} parent=0
    _
  %s5 = ssub.s32 1, %s3
  %s6 = scalar_select 0, %s5, %s3
  $region1: #{tpu_custom_call.1} parent=0
    #allocation4 [shape = 'u8[512]{0}', space=vmem, size = 0x400, scoped, tag = 'output window, operand 0, single buffered']
    #allocation5 [shape = 's32[1]{0}', space=sflag, size = 0x4, scoped, tag = 'scoped memory for tpu_custom_call.1']
    %7 = vsyncpa [#allocation5], 0
    // Predicated region
    $region2: #{tpu_custom_call.1} parent=1 // pred_check
      _
    $region3: #{tpu_custom_call.1} parent=1 // pred_check_branch
      %9 = sbr.rel (0) target = $region5
    $region4: #{tpu_custom_call.1} parent=1 // pred_region
      _
    $region5: #{tpu_custom_call.1} parent=1 // pred_fallthru
      _
    // Predicated region
    $region6: #{tpu_custom_call.1} parent=1 // pred_check
      _
    $region7: #{tpu_custom_call.1} parent=1 // pred_check_branch
      %11 = sbr.rel (0) target = $region9
    $region8: #{tpu_custom_call.1} parent=1 // pred_region
      _
    $region9: #{tpu_custom_call.1} parent=1 // pred_fallthru
      _
    %p12 = scmp.eq.s32.totalorder 0, 0
    // Predicated region
    $region10: #{tpu_custom_call.1} parent=1 // pred_check
      %p13 = pneg %p12
    $region11: #{tpu_custom_call.1} parent=1 // pred_check_branch
      %15 = sbr.rel (%p13) target = $region13
    $region12: #{tpu_custom_call.1} parent=1 // pred_region
      %vm16 = vcmask 0
      %17 = vst.msk [vmem:[#allocation2] sm:$0x1] %vm16, 0.0
      %18 = vst.msk [vmem:[#allocation3] sm:$0x1] %vm16, 0.0
    $region13: #{tpu_custom_call.1} parent=1 // pred_fallthru
      _
    %v19 = vld [vmem:[%s0] sm:$0xff]
    %v20 = vld [vmem:[%s1] sm:$0xff]
    %s21 = smul.u32 0, 8
    %v22 = vlaneseq
    %v23 = vshrl.u32 %v22, 7
    %v24 = vstv %s21
    %v25 = vadd.s32 %v24, %v23
    %vm26 = vcmp.lt.s32.totalorder %v25, 8
    %vm27 = vcmask 261120
    %v28 = vsel %vm27, %v19, -inf
    %29 = vmax.xlane.f32.xlu0 %v28
    %v30 = vpop.xlane.xlu0 %29
    %v31 = vsub.f32 %v19, %v30
    %v32 = vmul.f32 %v31, 1.442695
    %v33 = vpow.pop %v32
    %v34 = vsel %vm27, %v33, 0.0
    %35 = vadd.xlane.f32.xlu0 %v34
    %v36 = vpop.xlane.xlu0 %35
    %v37 = vlog2.pop %v36
    %v38 = vmul.f32 %v37, 0.6931472
    %v39 = vlaneseq
    %v40 = vand.u32 %v39, 127
    %41 = vset.pattern.permute.xlu0 0
    %42 = vperm.xlu0 %41, %v20
    %v43 = vpop.permute.xlu0 %42
    %vm44 = vcmp.eq.s32.totalorder %v40, %v43
    %v45 = vsel %vm44, %v31, 0.0
    %v46 = vsel %vm27, %v45, 0.0
    %47 = vadd.xlane.f32.xlu0 %v46
    %v48 = vpop.xlane.xlu0 %47
    %v49 = vsub.f32 %v48, %v38
    %v50 = vmul.f32 %v49, 1.442695
    %v51 = vpow.pop %v50
    %v52 = vsub.f32 1.0, %v51
    %v53 = vsub.f32 0.0, %v49
    %v54 = vsel %vm26, %v53, 0.0
    %v55 = vsel %vm26, %v52, 0.0
    %v56 = vld [vmem:[#allocation2] sm:$0x1]
    %vm57 = vcmask 7168
    %v58 = vsel %vm57, %v54, 0.0
    %59 = vadd.xlane.f32.xlu0 %v58
    %v60 = vpop.xlane.xlu0 %59
    %v61 = vrot.slane %v60, 4
    %v62 = vadd.f32 %v60, %v61
    %v63 = vrot.slane %v62, 2
    %v64 = vadd.f32 %v62, %v63
    %v65 = vrot.slane %v64, 1
    %v66 = vadd.f32 %v64, %v65
    %s67 = vtos %v66
    %v68 = vstv %s67
    %v69 = vadd.f32 %v56, %v68
    %vm70 = vcmask 0
    %71 = vst.msk [vmem:[#allocation2] sm:$0x1] %vm70, %v69
    %v72 = vld [vmem:[#allocation3] sm:$0x1]
    %v73 = vsel %vm57, %v55, 0.0
    %74 = vadd.xlane.f32.xlu0 %v73
    %v75 = vpop.xlane.xlu0 %74
    %v76 = vrot.slane %v75, 4
    %v77 = vadd.f32 %v75, %v76
    %v78 = vrot.slane %v77, 2
    %v79 = vadd.f32 %v77, %v78
    %v80 = vrot.slane %v79, 1
    %v81 = vadd.f32 %v79, %v80
    %s82 = vtos %v81
    %v83 = vstv %s82
    %v84 = vadd.f32 %v72, %v83
    %85 = vst.msk [vmem:[#allocation3] sm:$0x1] %vm70, %v84
    // Predicated region
    $region14: #{tpu_custom_call.1} parent=1 // pred_check
      %p86 = pneg %p12
    $region15: #{tpu_custom_call.1} parent=1 // pred_check_branch
      %88 = sbr.rel (%p86) target = $region17
    $region16: #{tpu_custom_call.1} parent=1 // pred_region
      %v89 = vld [vmem:[#allocation2] sm:$0x1]
      %v90 = vmul.f32 %v89, 0.125
      %v91 = vld [vmem:[#allocation3] sm:$0x1]
      %v92 = vmul.f32 %v91, 0.125
      %v93 = vmul.f32 %v92, %v90
      %94 = vst.msk [vmem:[#allocation4] sm:$0x1] %vm70, %v93
    $region17: #{tpu_custom_call.1} parent=1 // pred_fallthru
      _
    // Predicated region
    $region18: #{tpu_custom_call.1} parent=1 // pred_check
      _
    $region19: #{tpu_custom_call.1} parent=1 // pred_check_branch
      %96 = sbr.rel (0) target = $region21
    $region20: #{tpu_custom_call.1} parent=1 // pred_region
      %98 = vsyncadd [#allocation5], 0
      %s100 = sshll.u32 [#allocation4], 4
      %s101 = int_to_ptr.vmem [resolvable:$true] %s100
      %s102 = sshll.u32 %s2, 4
      %s103 = int_to_ptr.hbm [resolvable:$true] %s102
      %105 = dma.vmem_to_hbm [thread:$0]  %s101, 16, %s103, [#allocation5]
    $region21: #{tpu_custom_call.1} parent=1 // pred_fallthru
      _
    // Predicated region
    $region22: #{tpu_custom_call.1} parent=1 // pred_check
      _
    $region23: #{tpu_custom_call.1} parent=1 // pred_check_branch
      %107 = sbr.rel (0) target = $region25
    $region24: #{tpu_custom_call.1} parent=1 // pred_region
      %109 = dma.done [#allocation5], 16
    $region25: #{tpu_custom_call.1} parent=1 // pred_fallthru
      _
    %110 = vsyncpa [#allocation5], 1

</llo_original>
